<compile_context>
chip_gen: v6e
topology: v6e:2x2x1
jax: 0.10.0
libtpu: 0.0.40
codegen_flags: <defaults>
</compile_context>

<pallas_src>
import numpy as np

import jax
import jax.numpy as jnp
from jax.experimental import pallas as pl
from jax.experimental.pallas import tpu as pltpu


def _copy_kernel(x_ref, o_ref):
    # Placeholder hot path: pure elementwise identity in VMEM.
    o_ref[...] = x_ref[...]


def _choose_row_tile(rows: int, cols: int, itemsize: int) -> int:
    """Pick a row-tile that is a multiple of the dtype's native sublane
    granularity and keeps each block around ~2 MiB (safe with double
    buffering of both input and output on v5e/v6e/v7x)."""
    sublane = max(8, 32 // itemsize)          # 8 for f32, 16 for bf16, 32 for int8
    target_bytes = 2 * 1024 * 1024            # ~2 MiB per buffer
    tr = max(1, target_bytes // max(1, cols * itemsize))
    tr = max(sublane, (tr // sublane) * sublane)
    if tr >= rows:
        # Single full-extent block: always satisfies the (8,128) rule.
        return rows
    return tr


def mymodel_forward(x: jax.Array) -> jax.Array:
    """Placeholder for MyModel.forward (original raises NotImplementedError)."""
    orig_shape = x.shape
    # Collapse to 2-D (rows, cols) so any rank is handled; last dim stays the
    # lane (fast) axis.
    if x.ndim == 0:
        x2 = x.reshape(1, 1)
    elif x.ndim == 1:
        x2 = x.reshape(1, x.shape[0])
    else:
        x2 = x.reshape(-1, x.shape[-1])

    rows, cols = x2.shape
    itemsize = jnp.dtype(x2.dtype).itemsize
    tr = _choose_row_tile(rows, cols, itemsize)

    y2 = pl.pallas_call(
        _copy_kernel,
        out_shape=jax.ShapeDtypeStruct(x2.shape, x2.dtype),
        grid_spec=pltpu.PrefetchScalarGridSpec(
            num_scalar_prefetch=0,
            grid=(pl.cdiv(rows, tr),),
            # Full-width, lane-dense blocks: one contiguous stripe per step.
            in_specs=[pl.BlockSpec((tr, cols), lambda i: (i, 0))],
            out_specs=pl.BlockSpec((tr, cols), lambda i: (i, 0)),
        ),
        # Identity: output aliases the input buffer (no second HBM allocation).
        input_output_aliases={0: 0},
        compiler_params=pltpu.CompilerParams(
            dimension_semantics=("parallel",),
            # Safe on all generations (v7x default scoped is already 32 MiB);
            # our blocks only need ~8 MiB total with double buffering.
            vmem_limit_bytes=32 << 20,
        ),
    )(x2)

    return y2.reshape(orig_shape)


if __name__ == "__main__":
    key = jax.random.PRNGKey(0)
    # Small deterministic example input (shape chosen arbitrarily since the
    # stub forward() takes no tensor arguments).
    x = jax.random.normal(key, (128, 512), dtype=jnp.float32)

    # Host-side reference copy taken BEFORE the call (the kernel aliases the
    # input buffer to the output).
    x_host = np.asarray(x)

    y = mymodel_forward(x)
    jax.block_until_ready(y)

    assert y.shape == x_host.shape and y.dtype == x_host.dtype
    assert np.allclose(np.asarray(y), x_host)
    print("KERNEL_OK")
</pallas_src>

<mosaic_0001>
module attributes {stable_mosaic.version = 11 : i64} {
  func.func @_copy_kernel(%arg0: i32, %arg1: memref<128x512xf32, #tpu.memory_space<vmem>>, %arg2: memref<128x512xf32, #tpu.memory_space<vmem>>) attributes {dimension_semantics = [#tpu.dimension_semantics<parallel>], iteration_bounds = array<i64: 1>, scalar_prefetch = 0 : i64, scratch_operands = 0 : i64, tpu.core_type = #tpu.core_type<tc>, window_params = [{transform_indices = @transform_0, window_bounds = array<i64: 128, 512>}, {transform_indices = @transform_1, window_bounds = array<i64: 128, 512>}]} {
    %c0 = arith.constant 0 : index
    %c0_0 = arith.constant 0 : index
    %0 = vector.load %arg1[%c0, %c0_0] : memref<128x512xf32, #tpu.memory_space<vmem>>, vector<128x512xf32>
    %c0_1 = arith.constant 0 : index
    %c0_2 = arith.constant 0 : index
    %1 = vector.load %arg2[%c0_1, %c0_2] : memref<128x512xf32, #tpu.memory_space<vmem>>, vector<128x512xf32>
    tpu.vector_store %arg2[%c0_1, %c0_2], %0 {strides = array<i32>} : memref<128x512xf32, #tpu.memory_space<vmem>>, vector<128x512xf32>,
    return
  }
  func.func @transform_0(%arg0: i32) -> (i32, i32) {
    %c0_i32 = arith.constant 0 : i32
    %c0_i32_0 = arith.constant 0 : i32
    return %arg0, %c0_i32 : i32, i32
  }
  func.func @transform_1(%arg0: i32) -> (i32, i32) {
    %c0_i32 = arith.constant 0 : i32
    %c0_i32_0 = arith.constant 0 : i32
    return %arg0, %c0_i32 : i32, i32
  }
}

</mosaic_0001>

<llo_original>
// kernel: tpu_custom_call.1
$region0: #{tpu_custom_call.1}
  #allocation0 [shape = 'u32[]', space=smem, size = 0x4, offset = 0x4, fixed_abs, tag = 'smem constant byte address 0x4 - core index']
  #allocation1 [shape = 'u32[144,128]{1,0:T(1,128)}', space=vmem, size = 0x12000, scoped, tag = 'internal scratch']
  %s0 = inlined_call_operand.hbm [shape: f32[128,512], index: 0, kind: input, shape index: {}, may-alias: {0,1}]
  %s1 = inlined_call_operand.hbm [shape: f32[128,512], index: 1, kind: output, shape index: {}, may-alias: {0,1}]
  %s2 = sld [smem:[#allocation0]]
  $region18: #{tpu_custom_call.1} parent=0
    _
  %s4 = ssub.s32 1, %s2
  %s5 = scalar_select 0, %s4, %s2
  $region1: #{tpu_custom_call.1} parent=0
    #allocation2 [shape = 'u8[262144]{0}', space=vmem, size = 0x40000, scoped, tag = 'input window, operand 0, single buffered']
    #allocation3 [shape = 's32[1]{0}', space=sflag, size = 0x4, scoped, tag = 'scoped memory for tpu_custom_call.1']
    #allocation4 [shape = 's32[1]{0}', space=sflag, size = 0x4, scoped, tag = 'scoped memory for tpu_custom_call.1']
    #allocation5 [shape = 'u8[262144]{0}', space=vmem, size = 0x40000, scoped, tag = 'output window, operand 0, single buffered']
    %6 = vsyncpa [#allocation3], 0
    %7 = vsyncpa [#allocation4], 0
    // Predicated region
    $region2: #{tpu_custom_call.1} parent=1 // pred_check
      _
    $region3: #{tpu_custom_call.1} parent=1 // pred_check_branch
      %9 = sbr.rel (0) target = $region5
    $region4: #{tpu_custom_call.1} parent=1 // pred_region
      %s11 = ssub.s32 8192, 8192
      %12 = vsyncadd [#allocation3], %s11
      %s13 = sshll.u32 [#allocation2], 4
      %s14 = int_to_ptr.vmem [resolvable:$true] %s13
      %19 = dma.hbm_to_vmem [thread:$0]  %s0, 8192, %s14, [#allocation3], 512, 512, 32
    $region5: #{tpu_custom_call.1} parent=1 // pred_fallthru
      _
    // Predicated region
    $region6: #{tpu_custom_call.1} parent=1 // pred_check
      _
    $region7: #{tpu_custom_call.1} parent=1 // pred_check_branch
      %21 = sbr.rel (0) target = $region9
    $region8: #{tpu_custom_call.1} parent=1 // pred_region
      %22 = dma.done [#allocation3], 8192
    $region9: #{tpu_custom_call.1} parent=1 // pred_fallthru
      _
    %v23 = vld [vmem:[#allocation2] sm:$0xff]
    %v24 = vld [vmem:[#allocation2 + $0x8] sm:$0xff]
    %v25 = vld [vmem:[#allocation2 + $0x10] sm:$0xff]
    %v26 = vld [vmem:[#allocation2 + $0x18] sm:$0xff]
    %v27 = vld [vmem:[#allocation2 + $0x20] sm:$0xff]
    %v28 = vld [vmem:[#allocation2 + $0x28] sm:$0xff]
    %v29 = vld [vmem:[#allocation2 + $0x30] sm:$0xff]
    %v30 = vld [vmem:[#allocation2 + $0x38] sm:$0xff]
    %v31 = vld [vmem:[#allocation2 + $0x40] sm:$0xff]
    %v32 = vld [vmem:[#allocation2 + $0x48] sm:$0xff]
    %v33 = vld [vmem:[#allocation2 + $0x50] sm:$0xff]
    %v34 = vld [vmem:[#allocation2 + $0x58] sm:$0xff]
    %v35 = vld [vmem:[#allocation2 + $0x60] sm:$0xff]
    %v36 = vld [vmem:[#allocation2 + $0x68] sm:$0xff]
    %v37 = vld [vmem:[#allocation2 + $0x70] sm:$0xff]
    %v38 = vld [vmem:[#allocation2 + $0x78] sm:$0xff]
    %v39 = vld [vmem:[#allocation2 + $0x80] sm:$0xff]
    %v40 = vld [vmem:[#allocation2 + $0x88] sm:$0xff]
    %v41 = vld [vmem:[#allocation2 + $0x90] sm:$0xff]
    %v42 = vld [vmem:[#allocation2 + $0x98] sm:$0xff]
    %v43 = vld [vmem:[#allocation2 + $0xa0] sm:$0xff]
    %v44 = vld [vmem:[#allocation2 + $0xa8] sm:$0xff]
    %v45 = vld [vmem:[#allocation2 + $0xb0] sm:$0xff]
    %v46 = vld [vmem:[#allocation2 + $0xb8] sm:$0xff]
    %v47 = vld [vmem:[#allocation2 + $0xc0] sm:$0xff]
    %v48 = vld [vmem:[#allocation2 + $0xc8] sm:$0xff]
    %v49 = vld [vmem:[#allocation2 + $0xd0] sm:$0xff]
    %v50 = vld [vmem:[#allocation2 + $0xd8] sm:$0xff]
    %v51 = vld [vmem:[#allocation2 + $0xe0] sm:$0xff]
    %v52 = vld [vmem:[#allocation2 + $0xe8] sm:$0xff]
    %v53 = vld [vmem:[#allocation2 + $0xf0] sm:$0xff]
    %v54 = vld [vmem:[#allocation2 + $0xf8] sm:$0xff]
    %v55 = vld [vmem:[#allocation2 + $0x100] sm:$0xff]
    %v56 = vld [vmem:[#allocation2 + $0x108] sm:$0xff]
    %v57 = vld [vmem:[#allocation2 + $0x110] sm:$0xff]
    %v58 = vld [vmem:[#allocation2 + $0x118] sm:$0xff]
    %v59 = vld [vmem:[#allocation2 + $0x120] sm:$0xff]
    %v60 = vld [vmem:[#allocation2 + $0x128] sm:$0xff]
    %v61 = vld [vmem:[#allocation2 + $0x130] sm:$0xff]
    %v62 = vld [vmem:[#allocation2 + $0x138] sm:$0xff]
    %v63 = vld [vmem:[#allocation2 + $0x140] sm:$0xff]
    %v64 = vld [vmem:[#allocation2 + $0x148] sm:$0xff]
    %v65 = vld [vmem:[#allocation2 + $0x150] sm:$0xff]
    %v66 = vld [vmem:[#allocation2 + $0x158] sm:$0xff]
    %v67 = vld [vmem:[#allocation2 + $0x160] sm:$0xff]
    %v68 = vld [vmem:[#allocation2 + $0x168] sm:$0xff]
    %v69 = vld [vmem:[#allocation2 + $0x170] sm:$0xff]
    %v70 = vld [vmem:[#allocation2 + $0x178] sm:$0xff]
    %v71 = vld [vmem:[#allocation2 + $0x180] sm:$0xff]
    %v72 = vld [vmem:[#allocation2 + $0x188] sm:$0xff]
    %v73 = vld [vmem:[#allocation2 + $0x190] sm:$0xff]
    %v74 = vld [vmem:[#allocation2 + $0x198] sm:$0xff]
    %v75 = vld [vmem:[#allocation2 + $0x1a0] sm:$0xff]
    %v76 = vld [vmem:[#allocation2 + $0x1a8] sm:$0xff]
    %v77 = vld [vmem:[#allocation2 + $0x1b0] sm:$0xff]
    %v78 = vld [vmem:[#allocation2 + $0x1b8] sm:$0xff]
    %v79 = vld [vmem:[#allocation2 + $0x1c0] sm:$0xff]
    %v80 = vld [vmem:[#allocation2 + $0x1c8] sm:$0xff]
    %v81 = vld [vmem:[#allocation2 + $0x1d0] sm:$0xff]
    %v82 = vld [vmem:[#allocation2 + $0x1d8] sm:$0xff]
    %v83 = vld [vmem:[#allocation2 + $0x1e0] sm:$0xff]
    %v84 = vld [vmem:[#allocation2 + $0x1e8] sm:$0xff]
    %v85 = vld [vmem:[#allocation2 + $0x1f0] sm:$0xff]
    %v86 = vld [vmem:[#allocation2 + $0x1f8] sm:$0xff]
    %87 = vst [vmem:[#allocation5] sm:$0xff] %v23
    %88 = vst [vmem:[#allocation5 + $0x8] sm:$0xff] %v24
    %89 = vst [vmem:[#allocation5 + $0x10] sm:$0xff] %v25
    %90 = vst [vmem:[#allocation5 + $0x18] sm:$0xff] %v26
    %91 = vst [vmem:[#allocation5 + $0x20] sm:$0xff] %v27
    %92 = vst [vmem:[#allocation5 + $0x28] sm:$0xff] %v28
    %93 = vst [vmem:[#allocation5 + $0x30] sm:$0xff] %v29
    %94 = vst [vmem:[#allocation5 + $0x38] sm:$0xff] %v30
    %95 = vst [vmem:[#allocation5 + $0x40] sm:$0xff] %v31
    %96 = vst [vmem:[#allocation5 + $0x48] sm:$0xff] %v32
    %97 = vst [vmem:[#allocation5 + $0x50] sm:$0xff] %v33
    %98 = vst [vmem:[#allocation5 + $0x58] sm:$0xff] %v34
    %99 = vst [vmem:[#allocation5 + $0x60] sm:$0xff] %v35
    %100 = vst [vmem:[#allocation5 + $0x68] sm:$0xff] %v36
    %101 = vst [vmem:[#allocation5 + $0x70] sm:$0xff] %v37
    %102 = vst [vmem:[#allocation5 + $0x78] sm:$0xff] %v38
    %103 = vst [vmem:[#allocation5 + $0x80] sm:$0xff] %v39
    %104 = vst [vmem:[#allocation5 + $0x88] sm:$0xff] %v40
    %105 = vst [vmem:[#allocation5 + $0x90] sm:$0xff] %v41
    %106 = vst [vmem:[#allocation5 + $0x98] sm:$0xff] %v42
    %107 = vst [vmem:[#allocation5 + $0xa0] sm:$0xff] %v43
    %108 = vst [vmem:[#allocation5 + $0xa8] sm:$0xff] %v44
    %109 = vst [vmem:[#allocation5 + $0xb0] sm:$0xff] %v45
    %110 = vst [vmem:[#allocation5 + $0xb8] sm:$0xff] %v46
    %111 = vst [vmem:[#allocation5 + $0xc0] sm:$0xff] %v47
    %112 = vst [vmem:[#allocation5 + $0xc8] sm:$0xff] %v48
    %113 = vst [vmem:[#allocation5 + $0xd0] sm:$0xff] %v49
    %114 = vst [vmem:[#allocation5 + $0xd8] sm:$0xff] %v50
    %115 = vst [vmem:[#allocation5 + $0xe0] sm:$0xff] %v51
    %116 = vst [vmem:[#allocation5 + $0xe8] sm:$0xff] %v52
    %117 = vst [vmem:[#allocation5 + $0xf0] sm:$0xff] %v53
    %118 = vst [vmem:[#allocation5 + $0xf8] sm:$0xff] %v54
    %119 = vst [vmem:[#allocation5 + $0x100] sm:$0xff] %v55
    %120 = vst [vmem:[#allocation5 + $0x108] sm:$0xff] %v56
    %121 = vst [vmem:[#allocation5 + $0x110] sm:$0xff] %v57
    %122 = vst [vmem:[#allocation5 + $0x118] sm:$0xff] %v58
    %123 = vst [vmem:[#allocation5 + $0x120] sm:$0xff] %v59
    %124 = vst [vmem:[#allocation5 + $0x128] sm:$0xff] %v60
    %125 = vst [vmem:[#allocation5 + $0x130] sm:$0xff] %v61
    %126 = vst [vmem:[#allocation5 + $0x138] sm:$0xff] %v62
    %127 = vst [vmem:[#allocation5 + $0x140] sm:$0xff] %v63
    %128 = vst [vmem:[#allocation5 + $0x148] sm:$0xff] %v64
    %129 = vst [vmem:[#allocation5 + $0x150] sm:$0xff] %v65
    %130 = vst [vmem:[#allocation5 + $0x158] sm:$0xff] %v66
    %131 = vst [vmem:[#allocation5 + $0x160] sm:$0xff] %v67
    %132 = vst [vmem:[#allocation5 + $0x168] sm:$0xff] %v68
    %133 = vst [vmem:[#allocation5 + $0x170] sm:$0xff] %v69
    %134 = vst [vmem:[#allocation5 + $0x178] sm:$0xff] %v70
    %135 = vst [vmem:[#allocation5 + $0x180] sm:$0xff] %v71
    %136 = vst [vmem:[#allocation5 + $0x188] sm:$0xff] %v72
    %137 = vst [vmem:[#allocation5 + $0x190] sm:$0xff] %v73
    %138 = vst [vmem:[#allocation5 + $0x198] sm:$0xff] %v74
    %139 = vst [vmem:[#allocation5 + $0x1a0] sm:$0xff] %v75
    %140 = vst [vmem:[#allocation5 + $0x1a8] sm:$0xff] %v76
    %141 = vst [vmem:[#allocation5 + $0x1b0] sm:$0xff] %v77
    %142 = vst [vmem:[#allocation5 + $0x1b8] sm:$0xff] %v78
    %143 = vst [vmem:[#allocation5 + $0x1c0] sm:$0xff] %v79
    %144 = vst [vmem:[#allocation5 + $0x1c8] sm:$0xff] %v80
    %145 = vst [vmem:[#allocation5 + $0x1d0] sm:$0xff] %v81
    %146 = vst [vmem:[#allocation5 + $0x1d8] sm:$0xff] %v82
    %147 = vst [vmem:[#allocation5 + $0x1e0] sm:$0xff] %v83
    %148 = vst [vmem:[#allocation5 + $0x1e8] sm:$0xff] %v84
    %149 = vst [vmem:[#allocation5 + $0x1f0] sm:$0xff] %v85
    %150 = vst [vmem:[#allocation5 + $0x1f8] sm:$0xff] %v86
    // Predicated region
    $region10: #{tpu_custom_call.1} parent=1 // pred_check
      _
    $region11: #{tpu_custom_call.1} parent=1 // pred_check_branch
      %152 = sbr.rel (0) target = $region13
    $region12: #{tpu_custom_call.1} parent=1 // pred_region
      %s154 = ssub.s32 8192, 8192
      %155 = vsyncadd [#allocation4], %s154
      %s156 = sshll.u32 [#allocation5], 4
      %s157 = int_to_ptr.vmem [resolvable:$true] %s156
      %162 = dma.vmem_to_hbm [thread:$0]  %s157, 8192, %s1, [#allocation4], 512, 512, 32
    $region13: #{tpu_custom_call.1} parent=1 // pred_fallthru
      _
    // Predicated region
    $region14: #{tpu_custom_call.1} parent=1 // pred_check
      _
    $region15: #{tpu_custom_call.1} parent=1 // pred_check_branch
      %164 = sbr.rel (0) target = $region17
    $region16: #{tpu_custom_call.1} parent=1 // pred_region
      %165 = dma.done [#allocation4], 8192
    $region17: #{tpu_custom_call.1} parent=1 // pred_fallthru
      _
    %166 = vsyncpa [#allocation3], 1
    %167 = vsyncpa [#allocation4], 1

</llo_original>
